<compile_context>
chip_gen: v5e
topology: v5e:2x2
jax: 0.10.0
libtpu: 0.0.40
codegen_flags: <defaults>
</compile_context>

<pallas_src>
import functools

import jax
import jax.numpy as jnp
from jax.experimental import pallas as pl
from jax.experimental.pallas import tpu as pltpu


def _round_up(x, m):
    return ((x + m - 1) // m) * m


def _fit_rows(a, rows):
    """Cheap O(N*H) row resize (slice or zero-pad) so stage-1/stage-2 paddings can differ."""
    r = a.shape[0]
    if r == rows:
        return a
    if r > rows:
        return a[:rows]
    return jnp.pad(a, [(0, rows - r)] + [(0, 0)] * (a.ndim - 1))


# ----------------------------------------------------------------------------
# Stage 1: per row-tile, z = x @ W_neigh (bf16) and base = x @ W_self + bias (f32).
# Inputs are bf16 (single-pass MXU), accumulation f32.
# ----------------------------------------------------------------------------
def _precompute_kernel(x_ref, w_self_ref, w_neigh_ref, b_ref, z_ref, base_ref):
    x = x_ref[...]  # bf16 (tm1, F)
    z = jnp.dot(x, w_neigh_ref[...], preferred_element_type=jnp.float32)
    z_ref[...] = z.astype(z_ref.dtype)  # bf16
    base_ref[...] = (
        jnp.dot(x, w_self_ref[...], preferred_element_type=jnp.float32) + b_ref[...]
    )


# ----------------------------------------------------------------------------
# Stage 2: out[i] = (1/deg[i]) * sum_k mask[i, k] @ z[k]  + base[i].
# Grid = (row tiles "parallel", contraction tiles "arbitrary").
# The f32 output block is resident across k and used directly as the accumulator.
# ----------------------------------------------------------------------------
def _aggregate_kernel(mask_ref, z_ref, base_ref, dinv_ref, out_ref, *, tk, z_resident):
    k = pl.program_id(1)

    @pl.when(k == 0)
    def _():
        out_ref[...] = jnp.zeros_like(out_ref)

    # Exact 0/1 mask: int8 -> f32 -> bf16 (both converts are cheap VPU ops in a
    # memory-bound loop; values are exactly representable).
    mask = mask_ref[...].astype(jnp.float32).astype(jnp.bfloat16)

    if z_resident:
        # z block is the whole (n_pk, h_pad) array, DMA'd once; slice the k-th chunk.
        off = pl.multiple_of(k * tk, tk)
        z_blk = z_ref[pl.ds(off, tk), :]
    else:
        z_blk = z_ref[...]

    out_ref[...] += jnp.dot(mask, z_blk, preferred_element_type=jnp.float32)

    @pl.when(k == pl.num_programs(1) - 1)
    def _():
        out_ref[...] = out_ref[...] * dinv_ref[...] + base_ref[...]


def graphsage_forward(adj_mask, deg_recip, x, w_self, w_neigh, bias, *,
                      tm=256, tk=512, tm1=512):
    """SAGEConv('mean') forward.

    adj_mask:  [N, N] 0/1 mask (any int/float dtype), adj_mask[i, j] = 1 iff edge j -> i.
    deg_recip: [N] f32, 1/in_deg (0 for isolated nodes).
    x: [N, F_in] features.  w_self/w_neigh: [F_in, H].  bias: [H].
    """
    n, f_in = x.shape
    h = w_self.shape[1]
    assert adj_mask.shape == (n, n)

    f_pad = _round_up(f_in, 128)
    h_pad = _round_up(h, 128)

    # Row tile: multiple of 32 (native int8 sublane tile).  Cap so grid_i >= 2 when the
    # graph is big enough, so the "parallel" axis can shard across both v7x TensorCores.
    tm_eff = min(tm, _round_up(n, 32))
    if n >= 64:
        tm_eff = min(tm_eff, _round_up((n + 1) // 2, 32))
    tk_eff = min(tk, _round_up(n, 128))          # mask lane dim: multiple of 128
    tm1_eff = min(tm1, _round_up(n, 32))

    n_pi = _round_up(n, tm_eff)    # mask rows / out / base / dinv rows
    n_pk = _round_up(n, tk_eff)    # mask cols / z rows
    n_p1 = _round_up(n, tm1_eff)   # stage-1 rows

    bf16 = jnp.bfloat16
    f32 = jnp.float32

    x_p = jnp.zeros((n_p1, f_pad), bf16).at[:n, :f_in].set(x.astype(bf16))
    w_self_p = jnp.zeros((f_pad, h_pad), bf16).at[:f_in, :h].set(w_self.astype(bf16))
    w_neigh_p = jnp.zeros((f_pad, h_pad), bf16).at[:f_in, :h].set(w_neigh.astype(bf16))
    bias_p = jnp.zeros((1, h_pad), f32).at[0, :h].set(bias.astype(f32))
    mask_p = jnp.zeros((n_pi, n_pk), jnp.int8).at[:n, :n].set(adj_mask.astype(jnp.int8))
    dinv_p = jnp.zeros((n_pi, 1), f32).at[:n, 0].set(deg_recip.astype(f32))

    vmem_limit = 48 * 1024 * 1024  # fits v7x's 64 MiB/TC; plenty of headroom on v5e/v6e

    # ---------------- Stage 1 ----------------
    z_p, base_p = pl.pallas_call(
        _precompute_kernel,
        out_shape=(
            jax.ShapeDtypeStruct((n_p1, h_pad), bf16),  # z = x @ W_neigh
            jax.ShapeDtypeStruct((n_p1, h_pad), f32),   # base = x @ W_self + b
        ),
        grid_spec=pltpu.PrefetchScalarGridSpec(
            num_scalar_prefetch=0,
            grid=(n_p1 // tm1_eff,),
            in_specs=[
                pl.BlockSpec((tm1_eff, f_pad), lambda i: (i, 0)),
                pl.BlockSpec((f_pad, h_pad), lambda i: (0, 0)),
                pl.BlockSpec((f_pad, h_pad), lambda i: (0, 0)),
                pl.BlockSpec((1, h_pad), lambda i: (0, 0)),
            ],
            out_specs=(
                pl.BlockSpec((tm1_eff, h_pad), lambda i: (i, 0)),
                pl.BlockSpec((tm1_eff, h_pad), lambda i: (i, 0)),
            ),
        ),
        compiler_params=pltpu.CompilerParams(
            dimension_semantics=("parallel",),
            vmem_limit_bytes=vmem_limit,
        ),
        cost_estimate=pl.CostEstimate(
            flops=4 * n_p1 * f_pad * h_pad,
            transcendentals=0,
            bytes_accessed=n_p1 * f_pad * 2 + 2 * f_pad * h_pad * 2
            + n_p1 * h_pad * (2 + 4),
        ),
    )(x_p, w_self_p, w_neigh_p, bias_p)

    # Row-resize (cheap, O(N*H)) to the independently-chosen stage-2 paddings.
    z_p = _fit_rows(z_p, n_pk)
    base_p = _fit_rows(base_p, n_pi)

    # Keep z fully VMEM-resident (double-buffered by the pipeline) when it fits a
    # conservative budget sized for v7x; otherwise stream per-k tiles.
    z_resident = (2 * n_pk * h_pad * 2) <= (12 * 1024 * 1024)
    if z_resident:
        z_spec = pl.BlockSpec((n_pk, h_pad), lambda i, k: (0, 0))
    else:
        z_spec = pl.BlockSpec((tk_eff, h_pad), lambda i, k: (k, 0))

    grid_i = n_pi // tm_eff
    grid_k = n_pk // tk_eff

    # ---------------- Stage 2 ----------------
    out_p = pl.pallas_call(
        functools.partial(_aggregate_kernel, tk=tk_eff, z_resident=z_resident),
        out_shape=jax.ShapeDtypeStruct((n_pi, h_pad), f32),
        grid_spec=pltpu.PrefetchScalarGridSpec(
            num_scalar_prefetch=0,
            grid=(grid_i, grid_k),
            in_specs=[
                pl.BlockSpec((tm_eff, tk_eff), lambda i, k: (i, k)),   # int8 mask tile
                z_spec,                                                 # bf16 z
                pl.BlockSpec((tm_eff, h_pad), lambda i, k: (i, 0)),    # f32 base tile
                pl.BlockSpec((tm_eff, 1), lambda i, k: (i, 0)),        # f32 1/deg column
            ],
            out_specs=pl.BlockSpec((tm_eff, h_pad), lambda i, k: (i, 0)),
        ),
        compiler_params=pltpu.CompilerParams(
            dimension_semantics=("parallel", "arbitrary"),
            vmem_limit_bytes=vmem_limit,
        ),
        cost_estimate=pl.CostEstimate(
            flops=2 * n_pi * n_pk * h_pad,
            transcendentals=0,
            bytes_accessed=n_pi * n_pk * 1          # int8 mask, read once
            + n_pk * h_pad * 2                       # resident z
            + n_pi * h_pad * (4 + 4)                 # base in, out f32
            + n_pi * 4,
        ),
    )(mask_p, z_p, base_p, dinv_p)

    return out_p[:n, :h].astype(x.dtype)


# ----------------------------------------------------------------------------
# Host-side helpers + self-check.
# ----------------------------------------------------------------------------
def _build_graph(n, src, dst):
    """Dense 0/1 mask (dst receives from src) and per-row reciprocal in-degree."""
    mask = jnp.zeros((n, n), jnp.int8).at[dst, src].set(1)
    deg = mask.astype(jnp.float32).sum(axis=1)
    dinv = jnp.where(deg > 0, 1.0 / jnp.maximum(deg, 1.0), 0.0).astype(jnp.float32)
    return mask, dinv


def _reference(mask, dinv, x, w_self, w_neigh, bias):
    h_neigh = (mask.astype(jnp.float32) @ x) * dinv[:, None]
    return x @ w_self + h_neigh @ w_neigh + bias[None, :]


if __name__ == "__main__":
    # --- Toy shapes consistent with the module: 4 nodes, in_feats=5, hidden=8. ---
    N, IN_FEATS, HIDDEN = 4, 5, 8

    key = jax.random.PRNGKey(0)
    k_feat, k_ws, k_wn = jax.random.split(key, 3)

    # features = torch.rand((4, in_feats))  -> uniform [0, 1)
    features = jax.random.uniform(k_feat, (N, IN_FEATS), dtype=jnp.float32)

    # Deterministic parameter init (SAGEConv: fc_self / fc_neigh weights, shared bias).
    w_self = jax.random.normal(k_ws, (IN_FEATS, HIDDEN), dtype=jnp.float32) * 0.1
    w_neigh = jax.random.normal(k_wn, (IN_FEATS, HIDDEN), dtype=jnp.float32) * 0.1
    bias = jnp.zeros((HIDDEN,), dtype=jnp.float32)

    # Small directed example graph (src -> dst edges) over 4 nodes.
    src = jnp.array([0, 1, 2, 3, 0], dtype=jnp.int32)
    dst = jnp.array([1, 2, 3, 0, 2], dtype=jnp.int32)
    mask, dinv = _build_graph(N, src, dst)

    out = graphsage_forward(mask, dinv, features, w_self, w_neigh, bias)
    out = jax.block_until_ready(out)
    ref = _reference(mask, dinv, features, w_self, w_neigh, bias)
    assert out.shape == (N, HIDDEN)
    assert jnp.allclose(out, ref, atol=2e-2, rtol=2e-2), \
        float(jnp.max(jnp.abs(out - ref)))

    # --- Secondary check exercising multi-tile rows, resident z and the accumulator path. ---
    N2, E2 = 300, 1500
    k2 = jax.random.PRNGKey(1)
    k_f2, k_s2, k_d2 = jax.random.split(k2, 3)
    feats2 = jax.random.uniform(k_f2, (N2, IN_FEATS), dtype=jnp.float32)
    src2 = jax.random.randint(k_s2, (E2,), 0, N2, dtype=jnp.int32)
    dst2 = jax.random.randint(k_d2, (E2,), 0, N2, dtype=jnp.int32)
    mask2, dinv2 = _build_graph(N2, src2, dst2)

    out2 = graphsage_forward(mask2, dinv2, feats2, w_self, w_neigh, bias)
    out2 = jax.block_until_ready(out2)
    ref2 = _reference(mask2, dinv2, feats2, w_self, w_neigh, bias)
    assert out2.shape == (N2, HIDDEN)
    assert jnp.allclose(out2, ref2, atol=3e-2, rtol=3e-2), \
        float(jnp.max(jnp.abs(out2 - ref2)))

    print("KERNEL_OK")
</pallas_src>

<mosaic_0001>
module attributes {stable_mosaic.version = 11 : i64} {
  func.func @_precompute_kernel(%arg0: i32, %arg1: memref<32x128xbf16, #tpu.memory_space<vmem>>, %arg2: memref<128x128xbf16, #tpu.memory_space<vmem>>, %arg3: memref<128x128xbf16, #tpu.memory_space<vmem>>, %arg4: memref<1x128xf32, #tpu.memory_space<vmem>>, %arg5: memref<32x128xbf16, #tpu.memory_space<vmem>>, %arg6: memref<32x128xf32, #tpu.memory_space<vmem>>) attributes {dimension_semantics = [#tpu.dimension_semantics<parallel>], iteration_bounds = array<i64: 1>, scalar_prefetch = 0 : i64, scratch_operands = 0 : i64, tpu.core_type = #tpu.core_type<tc>, window_params = [{transform_indices = @transform_0, window_bounds = array<i64: 32, 128>}, {pipeline_mode = #tpu.pipeline_mode<synchronous>, transform_indices = @transform_1, window_bounds = array<i64: 128, 128>}, {pipeline_mode = #tpu.pipeline_mode<synchronous>, transform_indices = @transform_2, window_bounds = array<i64: 128, 128>}, {pipeline_mode = #tpu.pipeline_mode<synchronous>, transform_indices = @transform_3, window_bounds = array<i64: 1, 128>}, {transform_indices = @transform_4, window_bounds = array<i64: 32, 128>}, {transform_indices = @transform_5, window_bounds = array<i64: 32, 128>}]} {
    %c0 = arith.constant 0 : index
    %c0_0 = arith.constant 0 : index
    %0 = vector.load %arg1[%c0, %c0_0] : memref<32x128xbf16, #tpu.memory_space<vmem>>, vector<32x128xbf16>
    %c0_1 = arith.constant 0 : index
    %c0_2 = arith.constant 0 : index
    %1 = vector.load %arg3[%c0_1, %c0_2] : memref<128x128xbf16, #tpu.memory_space<vmem>>, vector<128x128xbf16>
    %cst = arith.constant dense<0.000000e+00> : vector<32x128xf32>
    %2 = tpu.matmul %0, %1, %cst {dimension_numbers = #tpu.dot_dimension_numbers<[1], [0], [0], [1], [0, 0, 1, 1], [], []>} : vector<32x128xbf16>, vector<128x128xbf16>, vector<32x128xf32> -> vector<32x128xf32>
    %3 = arith.truncf %2 : vector<32x128xf32> to vector<32x128xbf16>
    %c0_3 = arith.constant 0 : index
    %c0_4 = arith.constant 0 : index
    %4 = vector.load %arg5[%c0_3, %c0_4] : memref<32x128xbf16, #tpu.memory_space<vmem>>, vector<32x128xbf16>
    tpu.vector_store %arg5[%c0_3, %c0_4], %3 {strides = array<i32>} : memref<32x128xbf16, #tpu.memory_space<vmem>>, vector<32x128xbf16>,
    %c0_5 = arith.constant 0 : index
    %c0_6 = arith.constant 0 : index
    %5 = vector.load %arg2[%c0_5, %c0_6] : memref<128x128xbf16, #tpu.memory_space<vmem>>, vector<128x128xbf16>
    %cst_7 = arith.constant dense<0.000000e+00> : vector<32x128xf32>
    %6 = tpu.matmul %0, %5, %cst_7 {dimension_numbers = #tpu.dot_dimension_numbers<[1], [0], [0], [1], [0, 0, 1, 1], [], []>} : vector<32x128xbf16>, vector<128x128xbf16>, vector<32x128xf32> -> vector<32x128xf32>
    %c0_8 = arith.constant 0 : index
    %c0_9 = arith.constant 0 : index
    %7 = vector.load %arg4[%c0_8, %c0_9] : memref<1x128xf32, #tpu.memory_space<vmem>>, vector<1x128xf32>
    %8 = vector.broadcast %7 : vector<1x128xf32> to vector<32x128xf32>
    %9 = arith.addf %6, %8 : vector<32x128xf32>
    %c0_10 = arith.constant 0 : index
    %c0_11 = arith.constant 0 : index
    %10 = vector.load %arg6[%c0_10, %c0_11] : memref<32x128xf32, #tpu.memory_space<vmem>>, vector<32x128xf32>
    tpu.vector_store %arg6[%c0_10, %c0_11], %9 {strides = array<i32>} : memref<32x128xf32, #tpu.memory_space<vmem>>, vector<32x128xf32>,
    return
  }
  func.func @transform_0(%arg0: i32) -> (i32, i32) {
    %c0_i32 = arith.constant 0 : i32
    %c0_i32_0 = arith.constant 0 : i32
    return %arg0, %c0_i32 : i32, i32
  }
  func.func @transform_1(%arg0: i32) -> (i32, i32) {
    %c0_i32 = arith.constant 0 : i32
    %c0_i32_0 = arith.constant 0 : i32
    %c0_i32_1 = arith.constant 0 : i32
    return %c0_i32, %c0_i32_0 : i32, i32
  }
  func.func @transform_2(%arg0: i32) -> (i32, i32) {
    %c0_i32 = arith.constant 0 : i32
    %c0_i32_0 = arith.constant 0 : i32
    %c0_i32_1 = arith.constant 0 : i32
    return %c0_i32, %c0_i32_0 : i32, i32
  }
  func.func @transform_3(%arg0: i32) -> (i32, i32) {
    %c0_i32 = arith.constant 0 : i32
    %c0_i32_0 = arith.constant 0 : i32
    %c0_i32_1 = arith.constant 0 : i32
    return %c0_i32, %c0_i32_0 : i32, i32
  }
  func.func @transform_4(%arg0: i32) -> (i32, i32) {
    %c0_i32 = arith.constant 0 : i32
    %c0_i32_0 = arith.constant 0 : i32
    return %arg0, %c0_i32 : i32, i32
  }
  func.func @transform_5(%arg0: i32) -> (i32, i32) {
    %c0_i32 = arith.constant 0 : i32
    %c0_i32_0 = arith.constant 0 : i32
    return %arg0, %c0_i32 : i32, i32
  }
}

</mosaic_0001>

<llo_original>
// kernel: tpu_custom_call.1
$region0: #{tpu_custom_call.1}
  #allocation0 [shape = 'u32[]', space=smem, size = 0x4, offset = 0x4, fixed_abs, tag = 'smem constant byte address 0x4 - core index']
  #allocation1 [shape = 'u32[72,128]{1,0:T(1,128)}', space=vmem, size = 0x9000, scoped, tag = 'internal scratch']
  %s0 = inlined_call_operand.hbm [shape: bf16[32,128], index: 0, kind: input, shape index: {}]
  %s1 = inlined_call_operand.hbm [shape: bf16[128,128], index: 1, kind: input, shape index: {}]
  %s2 = inlined_call_operand.hbm [shape: bf16[128,128], index: 2, kind: input, shape index: {}]
  %s3 = inlined_call_operand.vmem [shape: f32[1,128], index: 3, kind: input, shape index: {}]
  %s4 = inlined_call_operand.hbm [shape: bf16[32,128], index: 4, kind: output, shape index: {0}]
  %s5 = inlined_call_operand.hbm [shape: f32[32,128], index: 5, kind: output, shape index: {1}]
  %6 = xla_tuple %s4, %s5
  %s7 = sld [smem:[#allocation0]]
  $region46: #{tpu_custom_call.1} parent=0
    _
  %s9 = ssub.s32 1, %s7
  %s10 = scalar_select 0, %s9, %s7
  $region1: #{tpu_custom_call.1} parent=0
    #allocation2 [shape = 'u8[8192]{0}', space=vmem, size = 0x2000, scoped, tag = 'input window, operand 0, single buffered']
    #allocation3 [shape = 's32[1]{0}', space=sflag, size = 0x4, scoped, tag = 'scoped memory for tpu_custom_call.1']
    #allocation4 [shape = 's32[1]{0}', space=sflag, size = 0x4, scoped, tag = 'scoped memory for tpu_custom_call.1']
    #allocation5 [shape = 'u8[32768]{0}', space=vmem, size = 0x8000, scoped, tag = 'input window, operand 1, single buffered']
    #allocation6 [shape = 's32[1]{0}', space=sflag, size = 0x4, scoped, tag = 'scoped memory for tpu_custom_call.1']
    #allocation7 [shape = 'u8[32768]{0}', space=vmem, size = 0x8000, scoped, tag = 'input window, operand 2, single buffered']
    #allocation8 [shape = 'u8[8192]{0}', space=vmem, size = 0x2000, scoped, tag = 'output window, operand 0, single buffered']
    #allocation9 [shape = 'u8[16384]{0}', space=vmem, size = 0x4000, scoped, tag = 'output window, operand 1, single buffered']
    #allocation10 [shape = 's32[1]{0}', space=sflag, size = 0x4, scoped, tag = 'scoped memory for tpu_custom_call.1']
    %11 = vsyncpa [#allocation3], 0
    %12 = vsyncpa [#allocation6], 0
    %13 = vsyncpa [#allocation4], 0
    %14 = vsyncpa [#allocation10], 0
    // Predicated region
    $region2: #{tpu_custom_call.1} parent=1 // pred_check
      _
    $region3: #{tpu_custom_call.1} parent=1 // pred_check_branch
      %16 = sbr.rel (0) target = $region5
    $region4: #{tpu_custom_call.1} parent=1 // pred_region
      %18 = vsyncadd [#allocation3], 0
      %s19 = sshll.u32 %s0, 4
      %s20 = int_to_ptr.hbm [resolvable:$true] %s19
      %s21 = sshll.u32 [#allocation2], 4
      %s22 = int_to_ptr.vmem [resolvable:$true] %s21
      %27 = dma.hbm_to_vmem [thread:$0]  %s20, 256, %s22, [#allocation3], 64, 64, 4
    $region5: #{tpu_custom_call.1} parent=1 // pred_fallthru
      _
    // Predicated region
    $region6: #{tpu_custom_call.1} parent=1 // pred_check
      _
    $region7: #{tpu_custom_call.1} parent=1 // pred_check_branch
      %29 = sbr.rel (0) target = $region9
    $region8: #{tpu_custom_call.1} parent=1 // pred_region
      %31 = vsyncadd [#allocation6], 0
      %s32 = sshll.u32 %s1, 4
      %s33 = int_to_ptr.hbm [resolvable:$true] %s32
      %s34 = sshll.u32 [#allocation5], 4
      %s35 = int_to_ptr.vmem [resolvable:$true] %s34
      %40 = dma.hbm_to_vmem [thread:$0]  %s33, 1024, %s35, [#allocation6], 64, 64, 4
    $region9: #{tpu_custom_call.1} parent=1 // pred_fallthru
      _
    // Predicated region
    $region10: #{tpu_custom_call.1} parent=1 // pred_check
      _
    $region11: #{tpu_custom_call.1} parent=1 // pred_check_branch
      %42 = sbr.rel (0) target = $region13
    $region12: #{tpu_custom_call.1} parent=1 // pred_region
      %44 = vsyncadd [#allocation6], 0
      %s45 = sshll.u32 %s2, 4
      %s46 = int_to_ptr.hbm [resolvable:$true] %s45
      %s47 = sshll.u32 [#allocation7], 4
      %s48 = int_to_ptr.vmem [resolvable:$true] %s47
      %53 = dma.hbm_to_vmem [thread:$0]  %s46, 1024, %s48, [#allocation6], 64, 64, 4
    $region13: #{tpu_custom_call.1} parent=1 // pred_fallthru
      _
    // Predicated region
    $region14: #{tpu_custom_call.1} parent=1 // pred_check
      _
    $region15: #{tpu_custom_call.1} parent=1 // pred_check_branch
      %55 = sbr.rel (0) target = $region17
    $region16: #{tpu_custom_call.1} parent=1 // pred_region
      _
    $region17: #{tpu_custom_call.1} parent=1 // pred_fallthru
      _
    // Predicated region
    $region18: #{tpu_custom_call.1} parent=1 // pred_check
      _
    $region19: #{tpu_custom_call.1} parent=1 // pred_check_branch
      %57 = sbr.rel (0) target = $region21
    $region20: #{tpu_custom_call.1} parent=1 // pred_region
      %59 = dma.done [#allocation3], 256
    $region21: #{tpu_custom_call.1} parent=1 // pred_fallthru
      _
    // Predicated region
    $region22: #{tpu_custom_call.1} parent=1 // pred_check
      _
    $region23: #{tpu_custom_call.1} parent=1 // pred_check_branch
      %61 = sbr.rel (0) target = $region25
    $region24: #{tpu_custom_call.1} parent=1 // pred_region
      %63 = dma.done [#allocation6], 1024
    $region25: #{tpu_custom_call.1} parent=1 // pred_fallthru
      _
    // Predicated region
    $region26: #{tpu_custom_call.1} parent=1 // pred_check
      _
    $region27: #{tpu_custom_call.1} parent=1 // pred_check_branch
      %65 = sbr.rel (0) target = $region29
    $region28: #{tpu_custom_call.1} parent=1 // pred_region
      %67 = dma.done [#allocation6], 1024
    $region29: #{tpu_custom_call.1} parent=1 // pred_fallthru
      _
    %v68 = vld [vmem:[#allocation2] sm:$0xf]
    %v69 = vld [vmem:[#allocation2 + $0x4] sm:$0xf]
    %v70 = vld [vmem:[#allocation2 + $0x8] sm:$0xf]
    %v71 = vld [vmem:[#allocation2 + $0xc] sm:$0xf]
    %v72 = vld [vmem:[#allocation7] sm:$0xf]
    %v73 = vld [vmem:[#allocation7 + $0x4] sm:$0xf]
    %v74 = vld [vmem:[#allocation7 + $0x8] sm:$0xf]
    %v75 = vld [vmem:[#allocation7 + $0xc] sm:$0xf]
    %v76 = vld [vmem:[#allocation7 + $0x10] sm:$0xf]
    %v77 = vld [vmem:[#allocation7 + $0x14] sm:$0xf]
    %v78 = vld [vmem:[#allocation7 + $0x18] sm:$0xf]
    %v79 = vld [vmem:[#allocation7 + $0x1c] sm:$0xf]
    %v80 = vld [vmem:[#allocation7 + $0x20] sm:$0xf]
    %v81 = vld [vmem:[#allocation7 + $0x24] sm:$0xf]
    %v82 = vld [vmem:[#allocation7 + $0x28] sm:$0xf]
    %v83 = vld [vmem:[#allocation7 + $0x2c] sm:$0xf]
    %v84 = vld [vmem:[#allocation7 + $0x30] sm:$0xf]
    %v85 = vld [vmem:[#allocation7 + $0x34] sm:$0xf]
    %v86 = vld [vmem:[#allocation7 + $0x38] sm:$0xf]
    %v87 = vld [vmem:[#allocation7 + $0x3c] sm:$0xf]
    %v92 = vunpack.c.l.b16 %v68
    %v93 = vunpack.c.l.b16 %v69
    %v94 = vunpack.c.l.b16 %v70
    %v95 = vunpack.c.l.b16 %v71
    %v96 = vpack.c.b16 %v93, %v92
    %v97 = vpack.c.b16 %v95, %v94
    %v116 = vunpack.c.l.b16 %v72
    %v117 = vunpack.c.l.b16 %v73
    %v118 = vunpack.c.l.b16 %v74
    %v119 = vunpack.c.l.b16 %v75
    %v120 = vunpack.c.l.b16 %v76
    %v121 = vunpack.c.l.b16 %v77
    %v122 = vunpack.c.l.b16 %v78
    %v123 = vunpack.c.l.b16 %v79
    %v124 = vunpack.c.l.b16 %v80
    %v125 = vunpack.c.l.b16 %v81
    %v126 = vunpack.c.l.b16 %v82
    %v127 = vunpack.c.l.b16 %v83
    %v128 = vunpack.c.l.b16 %v84
    %v129 = vunpack.c.l.b16 %v85
    %v130 = vunpack.c.l.b16 %v86
    %v131 = vunpack.c.l.b16 %v87
    %v132 = vpack.c.b16 %v117, %v116
    %v133 = vpack.c.b16 %v119, %v118
    %v134 = vpack.c.b16 %v121, %v120
    %v135 = vpack.c.b16 %v123, %v122
    %v136 = vpack.c.b16 %v125, %v124
    %v137 = vpack.c.b16 %v127, %v126
    %v138 = vpack.c.b16 %v129, %v128
    %v139 = vpack.c.b16 %v131, %v130
    %148 = vmatpush.bf16.msra.mxu0 %v139
    %149 = vmatpush.bf16.msra.mxu0 %v138
    %150 = vmatpush.bf16.msra.mxu0 %v137
    %151 = vmatpush.bf16.msra.mxu0 %v136
    %152 = vmatpush.bf16.msra.mxu0 %v135
    %153 = vmatpush.bf16.msra.mxu0 %v134
    %154 = vmatpush.bf16.msra.mxu0 %v133
    %155 = vmatpush.bf16.msra.mxu0 %v132
    %156 = vmatmul.bf16.gmra.mxu0 %v96
    %v157 = vpop.f32.mrf.mxu0
    %v158 = vadd.f32 0.0, %v157
    %v159 = vpop.f32.mrf.mxu0
    %v160 = vadd.f32 0.0, %v159
    %161 = vmatmul.bf16.gmra.mxu0 %v97
    %v162 = vpop.f32.mrf.mxu0
    %v163 = vadd.f32 0.0, %v162
    %v164 = vpop.f32.mrf.mxu0
    %v165 = vadd.f32 0.0, %v164
    %166 = vdwg.mxu0
    %v167 = vpack.c.bf16 %v158, %v158
    %v168 = vpack.c.bf16 %v160, %v160
    %v169 = vpack.c.bf16 %v163, %v163
    %v170 = vpack.c.bf16 %v165, %v165
    %171 = vst [vmem:[#allocation8] sm:$0xf] %v167
    %172 = vst [vmem:[#allocation8 + $0x4] sm:$0xf] %v168
    %173 = vst [vmem:[#allocation8 + $0x8] sm:$0xf] %v169
    %174 = vst [vmem:[#allocation8 + $0xc] sm:$0xf] %v170
    %v175 = vld [vmem:[#allocation5] sm:$0xf]
    %v176 = vld [vmem:[#allocation5 + $0x4] sm:$0xf]
    %v177 = vld [vmem:[#allocation5 + $0x8] sm:$0xf]
    %v178 = vld [vmem:[#allocation5 + $0xc] sm:$0xf]
    %v179 = vld [vmem:[#allocation5 + $0x10] sm:$0xf]
    %v180 = vld [vmem:[#allocation5 + $0x14] sm:$0xf]
    %v181 = vld [vmem:[#allocation5 + $0x18] sm:$0xf]
    %v182 = vld [vmem:[#allocation5 + $0x1c] sm:$0xf]
    %v183 = vld [vmem:[#allocation5 + $0x20] sm:$0xf]
    %v184 = vld [vmem:[#allocation5 + $0x24] sm:$0xf]
    %v185 = vld [vmem:[#allocation5 + $0x28] sm:$0xf]
    %v186 = vld [vmem:[#allocation5 + $0x2c] sm:$0xf]
    %v187 = vld [vmem:[#allocation5 + $0x30] sm:$0xf]
    %v188 = vld [vmem:[#allocation5 + $0x34] sm:$0xf]
    %v189 = vld [vmem:[#allocation5 + $0x38] sm:$0xf]
    %v190 = vld [vmem:[#allocation5 + $0x3c] sm:$0xf]
    %v191 = vld [vmem:[%s3] sm:$0x1]
    %v193 = vperm.slane %v191, 0
    %v211 = vunpack.c.l.b16 %v175
    %v212 = vunpack.c.l.b16 %v176
    %v213 = vunpack.c.l.b16 %v177
    %v214 = vunpack.c.l.b16 %v178
    %v215 = vunpack.c.l.b16 %v179
    %v216 = vunpack.c.l.b16 %v180
    %v217 = vunpack.c.l.b16 %v181
    %v218 = vunpack.c.l.b16 %v182
    %v219 = vunpack.c.l.b16 %v183
    %v220 = vunpack.c.l.b16 %v184
    %v221 = vunpack.c.l.b16 %v185
    %v222 = vunpack.c.l.b16 %v186
    %v223 = vunpack.c.l.b16 %v187
    %v224 = vunpack.c.l.b16 %v188
    %v225 = vunpack.c.l.b16 %v189
    %v226 = vunpack.c.l.b16 %v190
    %v227 = vpack.c.b16 %v212, %v211
    %v228 = vpack.c.b16 %v214, %v213
    %v229 = vpack.c.b16 %v216, %v215
    %v230 = vpack.c.b16 %v218, %v217
    %v231 = vpack.c.b16 %v220, %v219
    %v232 = vpack.c.b16 %v222, %v221
    %v233 = vpack.c.b16 %v224, %v223
    %v234 = vpack.c.b16 %v226, %v225
    %243 = vmatpush.bf16.msra.mxu0 %v234
    %244 = vmatpush.bf16.msra.mxu0 %v233
    %245 = vmatpush.bf16.msra.mxu0 %v232
    %246 = vmatpush.bf16.msra.mxu0 %v231
    %247 = vmatpush.bf16.msra.mxu0 %v230
    %248 = vmatpush.bf16.msra.mxu0 %v229
    %249 = vmatpush.bf16.msra.mxu0 %v228
    %250 = vmatpush.bf16.msra.mxu0 %v227
    %251 = vmatmul.bf16.gmra.mxu0 %v96
    %v252 = vpop.f32.mrf.mxu0
    %v253 = vadd.f32 %v193, %v252
    %v254 = vpop.f32.mrf.mxu0
    %v255 = vadd.f32 %v193, %v254
    %256 = vmatmul.bf16.gmra.mxu0 %v97
    %v257 = vpop.f32.mrf.mxu0
    %v258 = vadd.f32 %v193, %v257
    %v259 = vpop.f32.mrf.mxu0
    %v260 = vadd.f32 %v193, %v259
    %261 = vdwg.mxu0
    %262 = vst [vmem:[#allocation9] sm:$0xff] %v253
    %263 = vst [vmem:[#allocation9 + $0x8] sm:$0xff] %v255
    %264 = vst [vmem:[#allocation9 + $0x10] sm:$0xff] %v258
    %265 = vst [vmem:[#allocation9 + $0x18] sm:$0xff] %v260
    // Predicated region
    $region30: #{tpu_custom_call.1} parent=1 // pred_check
      _
    $region31: #{tpu_custom_call.1} parent=1 // pred_check_branch
      %267 = sbr.rel (0) target = $region33
    $region32: #{tpu_custom_call.1} parent=1 // pred_region
      %269 = vsyncadd [#allocation4], 0
      %s270 = sshll.u32 [#allocation8], 4
      %s271 = int_to_ptr.vmem [resolvable:$true] %s270
      %s272 = sshll.u32 %s4, 4
      %s273 = int_to_ptr.hbm [resolvable:$true] %s272
      %278 = dma.vmem_to_hbm [thread:$0]  %s271, 256, %s273, [#allocation4], 64, 64, 4
    $region33: #{tpu_custom_call.1} parent=1 // pred_fallthru
      _
    // Predicated region
    $region34: #{tpu_custom_call.1} parent=1 // pred_check
      _
    $region35: #{tpu_custom_call.1} parent=1 // pred_check_branch
      %280 = sbr.rel (0) target = $region37
    $region36: #{tpu_custom_call.1} parent=1 // pred_region
      %282 = vsyncadd [#allocation10], 0
      %s283 = sshll.u32 [#allocation9], 4
      %s284 = int_to_ptr.vmem [resolvable:$true] %s283
      %s285 = sshll.u32 %s5, 4
      %s286 = int_to_ptr.hbm [resolvable:$true] %s285
      %291 = dma.vmem_to_hbm [thread:$0]  %s284, 512, %s286, [#allocation10], 128, 128, 8
    $region37: #{tpu_custom_call.1} parent=1 // pred_fallthru
      _
    // Predicated region
    $region38: #{tpu_custom_call.1} parent=1 // pred_check
      _
    $region39: #{tpu_custom_call.1} parent=1 // pred_check_branch
      %293 = sbr.rel (0) target = $region41
    $region40: #{tpu_custom_call.1} parent=1 // pred_region
      %295 = dma.done [#allocation4], 256
    $region41: #{tpu_custom_call.1} parent=1 // pred_fallthru
      _
    // Predicated region
    $region42: #{tpu_custom_call.1} parent=1 // pred_check
      _
    $region43: #{tpu_custom_call.1} parent=1 // pred_check_branch
      %297 = sbr.rel (0) target = $region45
    $region44: #{tpu_custom_call.1} parent=1 // pred_region
      %299 = dma.done [#allocation10], 512
    $region45: #{tpu_custom_call.1} parent=1 // pred_fallthru
      _
    %300 = vsyncpa [#allocation3], 1
    %301 = vsyncpa [#allocation6], 1
    %302 = vsyncpa [#allocation4], 1
    %303 = vsyncpa [#allocation10], 1

</llo_original>
